<compile_context>
chip_gen: v5e
topology: v5e:2x2
jax: 0.10.0
libtpu: 0.0.40
codegen_flags: <defaults>
</compile_context>

<pallas_src>
import math

import jax
import jax.numpy as jnp
from jax.experimental import pallas as pl
from jax.experimental.pallas import tpu as pltpu


# ----------------------------------------------------------------------------
# Kernel: F_tile[0, :] = sum_n c[n] * f_tile[n, :]
# ----------------------------------------------------------------------------
def _expectation_kernel(c_ref, f_ref, o_ref):
    # c_ref: (N, 1)  float32 per-sample coefficients
    # f_ref: (N, TD) feature tile (one batch element, all N samples)
    # o_ref: (1, TD) output tile
    prod = c_ref[...] * f_ref[...].astype(jnp.float32)
    o_ref[...] = jnp.sum(prod, axis=0, keepdims=True).astype(o_ref.dtype)


# ----------------------------------------------------------------------------
# Tiling helper: pick a lane-dense D-tile width TD
# ----------------------------------------------------------------------------
def _choose_lane_tile(D, N, itemsize, B):
    """Returns (TD, num_d_tiles). TD is a multiple of 128 or the full D."""
    if D <= 128:
        return D, 1                            # full-dim block (always legal)
    max_cols = D // 128                        # whole 128-lane columns in D
    feat_budget = 8 << 20                      # ~8 MiB per feature buffer
    cols = max(1, min(max_cols, feat_budget // (N * 128 * itemsize)))
    num_d = pl.cdiv(D, cols * 128)
    # v7x has 2 TensorCores per chip: make sure there are >= 2 grid steps so
    # both cores get work (no-op on v5e/v6e).
    if B * num_d < 2 and max_cols >= 2:
        cols = pl.cdiv(max_cols, 2)
        num_d = pl.cdiv(D, cols * 128)
    return cols * 128, num_d


# ----------------------------------------------------------------------------
# Wrapper (the nn.Module.forward equivalent)
# ----------------------------------------------------------------------------
def expectation_forward(features, attention, unnorm_atts=None, weights=None,
                        replace=False):
    """Equivalent of Expectation(replace).forward(features, attention, ...)."""
    B, N = attention.shape
    if weights is None:
        weights = jnp.ones_like(attention) / float(N)
    if unnorm_atts is not None:
        attention = unnorm_atts

    # Collapse both estimators into per-sample coefficients c[b, n].
    w = weights.astype(jnp.float32)
    a = attention.astype(jnp.float32)
    if replace:
        coeff = w
    else:
        w_tail = jnp.cumsum(w[:, ::-1], axis=1)[:, ::-1]     # sum_{m>=n} w[b,m]
        coeff = a * w_tail + w * (1.0 - jnp.cumsum(a, axis=1))
    coeff = coeff.reshape(B, N, 1)

    trailing = features.shape[2:]
    D = int(math.prod(trailing)) if trailing else 1
    f3 = features.reshape(B, N, D)                            # free view, no copy
    itemsize = int(jnp.dtype(features.dtype).itemsize)

    TD, num_d = _choose_lane_tile(D, N, itemsize, B)

    feat_block = N * TD * itemsize
    out_block = TD * itemsize
    vmem_limit = int(max(4 << 20,
                         min(48 << 20,                        # v7x-safe cap
                             2 * (feat_block + out_block)     # double buffers
                             + N * TD * 4                     # f32 product headroom
                             + (2 << 20))))

    cost = pl.CostEstimate(
        flops=2 * B * N * D,
        transcendentals=0,
        bytes_accessed=B * N * D * itemsize + B * D * itemsize + B * N * 8)

    out = pl.pallas_call(
        _expectation_kernel,
        out_shape=jax.ShapeDtypeStruct((B, 1, D), features.dtype),
        grid=(B, num_d),
        in_specs=[
            pl.BlockSpec((None, N, 1), lambda b, d: (b, 0, 0)),    # coefficients
            pl.BlockSpec((None, N, TD), lambda b, d: (b, 0, d)),   # features
        ],
        out_specs=pl.BlockSpec((None, 1, TD), lambda b, d: (b, 0, d)),
        compiler_params=pltpu.CompilerParams(
            dimension_semantics=("parallel", "parallel"),
            vmem_limit_bytes=vmem_limit),
        cost_estimate=cost,
    )(coeff, f3)

    return out.reshape((B,) + trailing)


# ----------------------------------------------------------------------------
# Pure-JAX reference (mirrors the PyTorch autograd.Function forwards)
# ----------------------------------------------------------------------------
def _reference_forward(features, attention, weights, replace):
    B, N = attention.shape
    trailing = features.shape[2:]
    f = features.reshape(B, N, -1).astype(jnp.float32)
    w = weights.astype(jnp.float32)[:, :, None]
    a = attention.astype(jnp.float32)[:, :, None]
    if replace:
        F = jnp.sum(w * f, axis=1)
    else:
        pm = 1.0 - jnp.cumsum(a, axis=1)
        F_est = jnp.cumsum(a * f, axis=1) + pm * f
        F = jnp.sum(w * F_est, axis=1)
    return F.reshape((B,) + trailing).astype(features.dtype)


# TODO(synk): only the forward pass of Expectation is implemented; the custom
# autograd backward rules would need a separate custom_vjp + kernels.

if __name__ == "__main__":
    key = jax.random.PRNGKey(0)
    k1, k2, k3, k4, k5 = jax.random.split(key, 5)

    B, N = 2, 8
    att_logits = jax.random.normal(k2, (B, N), dtype=jnp.float32)
    attention = jax.nn.softmax(att_logits, axis=1)
    w_default = jnp.ones_like(attention) / float(N)
    w_custom = jax.nn.softmax(jax.random.normal(k5, (B, N)), axis=1)

    # ---- Case 1: D multiple of 128 (C*H*W = 4*8*8 = 256) -----------------
    feats1 = jax.random.normal(k1, (B, N, 4, 8, 8), dtype=jnp.float32)
    out = jax.block_until_ready(
        expectation_forward(feats1, attention, replace=False))
    ref = _reference_forward(feats1, attention, w_default, False)
    assert out.shape == (B, 4, 8, 8)
    assert jnp.allclose(out, ref, atol=1e-5, rtol=1e-5)

    out = jax.block_until_ready(
        expectation_forward(feats1, attention, replace=True))
    ref = _reference_forward(feats1, attention, w_default, True)
    assert jnp.allclose(out, ref, atol=1e-5, rtol=1e-5)

    # ---- Case 2: D < 128, not a multiple (3*7*5 = 105), custom weights ---
    feats2 = jax.random.normal(k3, (B, N, 3, 7, 5), dtype=jnp.float32)
    out = jax.block_until_ready(
        expectation_forward(feats2, attention, weights=w_custom, replace=False))
    ref = _reference_forward(feats2, attention, w_custom, False)
    assert out.shape == (B, 3, 7, 5)
    assert jnp.allclose(out, ref, atol=1e-5, rtol=1e-5)

    # ---- Case 3: D > 128, not a multiple (3*8*8 = 192) --------------------
    # Exercises the partial last D-tile (no padding anywhere).
    feats3 = jax.random.normal(k4, (B, N, 3, 8, 8), dtype=jnp.float32)
    out = jax.block_until_ready(
        expectation_forward(feats3, attention, replace=False))
    ref = _reference_forward(feats3, attention, w_default, False)
    assert out.shape == (B, 3, 8, 8)
    assert jnp.allclose(out, ref, atol=1e-5, rtol=1e-5)

    print("KERNEL_OK")
</pallas_src>

<mosaic_0001>
module attributes {stable_mosaic.version = 11 : i64} {
  func.func @_expectation_kernel(%arg0: i32, %arg1: i32, %arg2: memref<1x8x1xf32, #tpu.memory_space<vmem>>, %arg3: memref<1x8x256xf32, #tpu.memory_space<vmem>>, %arg4: memref<1x1x256xf32, #tpu.memory_space<vmem>>) attributes {dimension_semantics = [#tpu.dimension_semantics<parallel>, #tpu.dimension_semantics<parallel>], iteration_bounds = array<i64: 2, 1>, scalar_prefetch = 0 : i64, scratch_operands = 0 : i64, tpu.core_type = #tpu.core_type<tc>, window_params = [{transform_indices = @transform_0, window_bounds = array<i64: 1, 8, 1>}, {transform_indices = @transform_1, window_bounds = array<i64: 1, 8, 256>}, {transform_indices = @transform_2, window_bounds = array<i64: 1, 1, 256>}]} {
    %c0 = arith.constant 0 : index
    %c0_0 = arith.constant 0 : index
    %c0_1 = arith.constant 0 : index
    %0 = vector.load %arg2[%c0, %c0_0, %c0_1] : memref<1x8x1xf32, #tpu.memory_space<vmem>>, vector<1x8x1xf32>
    %1 = vector.shape_cast %0 : vector<1x8x1xf32> to vector<8x1xf32>
    %c0_2 = arith.constant 0 : index
    %c0_3 = arith.constant 0 : index
    %c0_4 = arith.constant 0 : index
    %2 = vector.load %arg3[%c0_2, %c0_3, %c0_4] : memref<1x8x256xf32, #tpu.memory_space<vmem>>, vector<1x8x256xf32>
    %3 = vector.shape_cast %2 : vector<1x8x256xf32> to vector<8x256xf32>
    %4 = vector.broadcast %1 : vector<8x1xf32> to vector<8x256xf32>
    %5 = arith.mulf %4, %3 : vector<8x256xf32>
    %cst = arith.constant dense<0.000000e+00> : vector<256xf32>
    %6 = vector.multi_reduction <add>, %5, %cst [0] : vector<8x256xf32> to vector<256xf32>
    %7 = vector.shape_cast %6 : vector<256xf32> to vector<1x256xf32>
    %c0_5 = arith.constant 0 : index
    %c0_6 = arith.constant 0 : index
    %c0_7 = arith.constant 0 : index
    %8 = vector.load %arg4[%c0_5, %c0_6, %c0_7] : memref<1x1x256xf32, #tpu.memory_space<vmem>>, vector<1x1x256xf32>
    %9 = vector.shape_cast %8 : vector<1x1x256xf32> to vector<1x256xf32>
    %10 = vector.shape_cast %7 : vector<1x256xf32> to vector<1x1x256xf32>
    tpu.vector_store %arg4[%c0_5, %c0_6, %c0_7], %10 {strides = array<i32>} : memref<1x1x256xf32, #tpu.memory_space<vmem>>, vector<1x1x256xf32>,
    return
  }
  func.func @transform_0(%arg0: i32, %arg1: i32) -> (i32, i32, i32) {
    %c0_i32 = arith.constant 0 : i32
    %c0_i32_0 = arith.constant 0 : i32
    %c0_i32_1 = arith.constant 0 : i32
    return %arg0, %c0_i32, %c0_i32_0 : i32, i32, i32
  }
  func.func @transform_1(%arg0: i32, %arg1: i32) -> (i32, i32, i32) {
    %c0_i32 = arith.constant 0 : i32
    %c0_i32_0 = arith.constant 0 : i32
    return %arg0, %c0_i32, %arg1 : i32, i32, i32
  }
  func.func @transform_2(%arg0: i32, %arg1: i32) -> (i32, i32, i32) {
    %c0_i32 = arith.constant 0 : i32
    %c0_i32_0 = arith.constant 0 : i32
    return %arg0, %c0_i32, %arg1 : i32, i32, i32
  }
}

</mosaic_0001>

<llo_original>
// kernel: tpu_custom_call.1
$region0: #{tpu_custom_call.1}
  #allocation0 [shape = 'u32[]', space=smem, size = 0x4, offset = 0x4, fixed_abs, tag = 'smem constant byte address 0x4 - core index']
  #allocation1 [shape = 'u32[72,128]{1,0:T(1,128)}', space=vmem, size = 0x9000, scoped, tag = 'internal scratch']
  %s0 = inlined_call_operand.vmem [shape: f32[2,8,1], index: 0, kind: input, shape index: {}]
  %s1 = inlined_call_operand.hbm [shape: f32[2,8,256], index: 1, kind: input, shape index: {}]
  %s2 = inlined_call_operand.hbm [shape: f32[2,1,256], index: 2, kind: output, shape index: {}]
  %s3 = sld [smem:[#allocation0]]
  $region45: #{tpu_custom_call.1} parent=0
    _
  %s5 = ssub.s32 1, %s3
  %s6 = scalar_select 0, %s5, %s3
  $region1: #{tpu_custom_call.1} parent=0
    #allocation2 [shape = 'u8[16384]{0}', space=vmem, size = 0x4000, scoped, tag = 'input window, operand 1']
    #allocation3 [shape = 's32[2]{0}', space=sflag, size = 0x8, scoped, tag = 'scoped memory for tpu_custom_call.1']
    #allocation4 [shape = 's32[2]{0}', space=sflag, size = 0x8, scoped, tag = 'scoped memory for tpu_custom_call.1']
    #allocation5 [shape = 'u8[2048]{0}', space=vmem, size = 0x800, scoped, tag = 'output window, operand 0']
    %7 = vsyncpa [#allocation3], 0
    %s8 = scalar_lea.sflag [#allocation3], 1
    %9 = vsyncpa %s8, 0
    %10 = vsyncpa [#allocation4], 0
    %s11 = scalar_lea.sflag [#allocation4], 1
    %12 = vsyncpa %s11, 0
    loop: start=0, step=1, limit=4
    $region2: #{tpu_custom_call.1} parent=1 // loop_pre_header
      _
    $region3: #{tpu_custom_call.1} parent=1 // loop_header
      %s14 = sphi 0, %s18
      %p15 = scmp.ge.s32.totalorder %s14, 4
      %s21 = sphi 0, %s33
      %s22 = sphi 0, %s29
      %s23 = sphi 0, %s21
      %s24 = sphi 0, %s22
      %s25 = sphi 0, %s23
      %s26 = sphi 0, %s24
      %s36 = sphi 0, %s38
      %s39 = sphi 0, %s36
      %s40 = sphi 0, %s39
      %s56 = sphi 0, %s40
      %s64 = sphi 0, %s66
      %s67 = sphi 0, %s64
      %s68 = sphi 0, %s67
      %s84 = sphi 0, %s68
      %s92 = sphi 0, %s94
      %s95 = sphi 0, %s92
      %s96 = sphi 0, %s95
      %s112 = sphi 0, %s96
    $region4: #{tpu_custom_call.1} parent=1 // loop_header_branch
      %17 = sbr.rel (%p15) target = $region8
    $region5: #{tpu_custom_call.1} parent=1 // loop_body
      %s19 = ssub.s32 %s14, 1
      %s20 = ssub.s32 %s14, 2
      %s27 = sadd.s32 1, %s22
      %p28 = scmp.ge.s32.totalorder %s27, 1
      %s29 = scalar_select %p28, 0, %s27
      %s30 = sadd.s32 1, %s21
      %s31 = scalar_select %p28, %s30, %s21
      %p32 = scmp.ge.s32.totalorder %s31, 2
      %s33 = scalar_select %p32, 0, %s31
      %s34 = ssub.s32 %s21, %s33
      %p35 = scmp.eq.s32.totalorder %s34, 0
      %s37 = sadd.s32 %s36, 1
      %s38 = scalar_select %p35, %s36, %s37
      %p41 = pneg %p35
      %p42 = scmp.eq.s32.totalorder %s14, 1
      %p43 = por %p41, %p42
      %p44 = scmp.ne.s32.totalorder %s36, %s39
      %p45 = scmp.eq.s32.totalorder %s14, 0
      %p46 = por %p44, %p45
      %p47 = scmp.ne.s32.totalorder %s36, %s39
      %p48 = scmp.eq.s32.totalorder %s19, 1
      %p49 = por %p47, %p48
      %p50 = scmp.ne.s32.totalorder %s39, %s40
      %p51 = scmp.eq.s32.totalorder %s19, 0
      %p52 = por %p50, %p51
      %p53 = scmp.ne.s32.totalorder %s39, %s40
      %p54 = scmp.eq.s32.totalorder %s20, 1
      %p55 = por %p53, %p54
      %p57 = scmp.ne.s32.totalorder %s40, %s56
      %p58 = scmp.eq.s32.totalorder %s20, 0
      %p59 = por %p57, %p58
      %s60 = ssub.s32 %s21, %s33
      %s61 = ssub.s32 %s22, %s29
      %s62 = sor.u32 %s60, %s61
      %p63 = scmp.eq.s32.totalorder %s62, 0
      %s65 = sadd.s32 %s64, 1
      %s66 = scalar_select %p63, %s64, %s65
      %p69 = pneg %p63
      %p70 = scmp.eq.s32.totalorder %s14, 1
      %p71 = por %p69, %p70
      %p72 = scmp.ne.s32.totalorder %s64, %s67
      %p73 = scmp.eq.s32.totalorder %s14, 0
      %p74 = por %p72, %p73
      %p75 = scmp.ne.s32.totalorder %s64, %s67
      %p76 = scmp.eq.s32.totalorder %s19, 1
      %p77 = por %p75, %p76
      %p78 = scmp.ne.s32.totalorder %s67, %s68
      %p79 = scmp.eq.s32.totalorder %s19, 0
      %p80 = por %p78, %p79
      %p81 = scmp.ne.s32.totalorder %s67, %s68
      %p82 = scmp.eq.s32.totalorder %s20, 1
      %p83 = por %p81, %p82
      %p85 = scmp.ne.s32.totalorder %s68, %s84
      %p86 = scmp.eq.s32.totalorder %s20, 0
      %p87 = por %p85, %p86
      %s88 = ssub.s32 %s21, %s33
      %s89 = ssub.s32 %s22, %s29
      %s90 = sor.u32 %s88, %s89
      %p91 = scmp.eq.s32.totalorder %s90, 0
      %s93 = sadd.s32 %s92, 1
      %s94 = scalar_select %p91, %s92, %s93
      %p97 = pneg %p91
      %p98 = scmp.eq.s32.totalorder %s14, 1
      %p99 = por %p97, %p98
      %p100 = scmp.ne.s32.totalorder %s92, %s95
      %p101 = scmp.eq.s32.totalorder %s14, 0
      %p102 = por %p100, %p101
      %p103 = scmp.ne.s32.totalorder %s92, %s95
      %p104 = scmp.eq.s32.totalorder %s19, 1
      %p105 = por %p103, %p104
      %p106 = scmp.ne.s32.totalorder %s95, %s96
      %p107 = scmp.eq.s32.totalorder %s19, 0
      %p108 = por %p106, %p107
      %p109 = scmp.ne.s32.totalorder %s95, %s96
      %p110 = scmp.eq.s32.totalorder %s20, 1
      %p111 = por %p109, %p110
      %p113 = scmp.ne.s32.totalorder %s96, %s112
      %p114 = scmp.eq.s32.totalorder %s20, 0
      %p115 = por %p113, %p114
      %p116 = scmp.le.s32.totalorder 1, %s14
      %p117 = scmp.lt.s32.totalorder %s14, 3
      %p118 = pnand %p116, %p117
      %p119 = pneg %p118
      // Predicated region
      $region9: #{tpu_custom_call.1} parent=5 // pred_check
        _
      $region10: #{tpu_custom_call.1} parent=5 // pred_check_branch
        %121 = sbr.rel (%p118) target = $region12
      $region11: #{tpu_custom_call.1} parent=5 // pred_region
        %s122 = ssub.s32 %s14, 1
      $region12: #{tpu_custom_call.1} parent=5 // pred_fallthru
        _
      %p123 = scmp.lt.s32.totalorder %s14, 2
      // Predicated region
      $region13: #{tpu_custom_call.1} parent=5 // pred_check
        %p124 = pneg %p123
      $region14: #{tpu_custom_call.1} parent=5 // pred_check_branch
        %126 = sbr.rel (%p124) target = $region16
      $region15: #{tpu_custom_call.1} parent=5 // pred_region
        // Predicated region
        $region17: #{tpu_custom_call.1} parent=15 // pred_check
          %p127 = pneg %p46
        $region18: #{tpu_custom_call.1} parent=15 // pred_check_branch
          %129 = sbr.rel (%p127) target = $region20
        $region19: #{tpu_custom_call.1} parent=15 // pred_region
          %p130 = scmp.lt.s32.totalorder %s21, 1
          %s131 = scalar_select %p130, %s21, 1
          %s132 = smul.addr %s131, 8
          %s133 = scalar_lea.vmem %s0, %s132
        $region20: #{tpu_custom_call.1} parent=15 // pred_fallthru
          _
        // Predicated region
        $region21: #{tpu_custom_call.1} parent=15 // pred_check
          %p134 = pneg %p74
        $region22: #{tpu_custom_call.1} parent=15 // pred_check_branch
          %136 = sbr.rel (%p134) target = $region24
        $region23: #{tpu_custom_call.1} parent=15 // pred_region
          %s137 = sand.u32 %s64, 1
          %s138 = scalar_lea.sflag [#allocation3], %s137
          %s139 = sand.u32 %s64, 1
          %s140 = smul.addr %s139, 16
          %s141 = scalar_lea.vmem [#allocation2], %s140
          %s142 = smul.u32 2, %s22
          %144 = vsyncadd %s138, 0
          %s145 = smul.addr %s21, 2
          %s146 = sadd.s32 %s142, %s145
          %s147 = smul.addr %s146, 8
          %s148 = scalar_lea.hbm %s1, %s147
          %s150 = sshll.u32 %s148, 4
          %s151 = int_to_ptr.hbm [resolvable:$true] %s150
          %s152 = sshll.u32 %s141, 4
          %s153 = int_to_ptr.vmem [resolvable:$true] %s152
          %155 = dma.hbm_to_vmem [thread:$0]  %s151, 256, %s153, %s138
        $region24: #{tpu_custom_call.1} parent=15 // pred_fallthru
          _
      $region16: #{tpu_custom_call.1} parent=5 // pred_fallthru
        _
      %p156 = scmp.le.s32.totalorder 1, %s14
      %p157 = scmp.lt.s32.totalorder %s14, 3
      %p158 = pnand %p156, %p157
      %p159 = pneg %p158
      // Predicated region
      $region25: #{tpu_custom_call.1} parent=5 // pred_check
        _
      $region26: #{tpu_custom_call.1} parent=5 // pred_check_branch
        %161 = sbr.rel (%p158) target = $region28
      $region27: #{tpu_custom_call.1} parent=5 // pred_region
        %s162 = ssub.s32 %s14, 1
        %s163 = sand.u32 %s67, 1
        %s164 = scalar_lea.sflag [#allocation3], %s163
        %s165 = sand.u32 %s67, 1
        %s166 = smul.addr %s165, 16
        %s167 = scalar_lea.vmem [#allocation2], %s166
        // Predicated region
        $region29: #{tpu_custom_call.1} parent=27 // pred_check
          %p168 = pneg %p80
        $region30: #{tpu_custom_call.1} parent=27 // pred_check_branch
          %170 = sbr.rel (%p168) target = $region32
        $region31: #{tpu_custom_call.1} parent=27 // pred_region
          %172 = dma.done %s164, 256
        $region32: #{tpu_custom_call.1} parent=27 // pred_fallthru
          _
        %p173 = scmp.lt.s32.totalorder %s23, 1
        %s174 = scalar_select %p173, %s23, 1
        %s175 = smul.addr %s174, 8
        %s176 = scalar_lea.vmem %s0, %s175
        %p177 = pneg %p52
        %p178 = pneg %p49
        %s179 = sand.u32 %s67, 1
        %s180 = scalar_lea.sflag [#allocation3], %s179
        %s181 = sand.u32 %s67, 1
        %s182 = smul.addr %s181, 16
        %s183 = scalar_lea.vmem [#allocation2], %s182
        %p184 = pneg %p80
        %p185 = pneg %p77
        %p186 = pneg %p108
        %p187 = pneg %p105
        %s188 = sand.u32 %s95, 1
        %s189 = scalar_lea.sflag [#allocation4], %s188
        %s190 = sand.u32 %s95, 1
        %s191 = smul.addr %s190, 2
        %s192 = scalar_lea.vmem [#allocation5], %s191
        %p193 = scmp.lt.s32.totalorder %s23, 1
        %s194 = scalar_select %p193, %s23, 1
        %s195 = smul.addr %s194, 8
        %s196 = scalar_lea.vmem %s0, %s195
        %s197 = smul.u32 2, %s24
        %s198 = smul.u32 2, %s24
        %v199 = vld [vmem:[%s196] sm:$0xff]
        %v200 = vld [vmem:[%s167] sm:$0xff]
        %v201 = vld [vmem:[%s167 + $0x8] sm:$0xff]
        %203 = vset.pattern.permute.xlu0 0
        %204 = vperm.xlu0 %203, %v199
        %v205 = vpop.permute.xlu0 %204
        %v207 = vmul.f32 %v205, %v200
        %v208 = vmul.f32 %v205, %v201
        %v209 = vrot.slane %v207, 4
        %v210 = vadd.f32 %v207, %v209
        %v211 = vrot.slane %v210, 2
        %v212 = vadd.f32 %v210, %v211
        %v213 = vrot.slane %v212, 1
        %v214 = vadd.f32 %v212, %v213
        %v215 = vrot.slane %v208, 4
        %v216 = vadd.f32 %v208, %v215
        %v217 = vrot.slane %v216, 2
        %v218 = vadd.f32 %v216, %v217
        %v219 = vrot.slane %v218, 1
        %v220 = vadd.f32 %v218, %v219
        %v223 = vrot.slane %v220, 7
        %vm224 = vcmask 1040384
        %v225 = vsel %vm224, %v214, %v223
        %v227 = vlaneseq
        %vm228 = vcmp.ge.s32.totalorder %v227, 0
        %vm229 = vcmp.lt.s32.totalorder %v227, 256
        %vm230 = vmand %vm228, %vm229
        %231 = vst.msk [vmem:[%s192] sm:$0x3] %vm230, %v225
        %s232 = sand.u32 %s95, 1
        %s233 = scalar_lea.sflag [#allocation4], %s232
        %s234 = sand.u32 %s95, 1
        %s235 = smul.addr %s234, 2
        %s236 = scalar_lea.vmem [#allocation5], %s235
        // Predicated region
        $region33: #{tpu_custom_call.1} parent=27 // pred_check
          %p237 = pneg %p105
        $region34: #{tpu_custom_call.1} parent=27 // pred_check_branch
          %239 = sbr.rel (%p237) target = $region36
        $region35: #{tpu_custom_call.1} parent=27 // pred_region
          %s240 = smul.u32 2, %s24
          %242 = vsyncadd %s233, 0
          %s243 = smul.addr %s23, 2
          %s244 = sadd.s32 %s240, %s243
          %s245 = scalar_lea.hbm %s2, %s244
          %s247 = sshll.u32 %s236, 4
          %s248 = int_to_ptr.vmem [resolvable:$true] %s247
          %s249 = sshll.u32 %s245, 4
          %s250 = int_to_ptr.hbm [resolvable:$true] %s249
          %252 = dma.vmem_to_hbm [thread:$0]  %s248, 32, %s250, %s233
        $region36: #{tpu_custom_call.1} parent=27 // pred_fallthru
          _
      $region28: #{tpu_custom_call.1} parent=5 // pred_fallthru
        _
      %p253 = scmp.le.s32.totalorder 2, %s14
      // Predicated region
      $region37: #{tpu_custom_call.1} parent=5 // pred_check
        %p254 = pneg %p253
      $region38: #{tpu_custom_call.1} parent=5 // pred_check_branch
        %256 = sbr.rel (%p254) target = $region40
      $region39: #{tpu_custom_call.1} parent=5 // pred_region
        %s257 = ssub.s32 %s14, 2
        // Predicated region
        $region41: #{tpu_custom_call.1} parent=39 // pred_check
          %p258 = pneg %p111
        $region42: #{tpu_custom_call.1} parent=39 // pred_check_branch
          %260 = sbr.rel (%p258) target = $region44
        $region43: #{tpu_custom_call.1} parent=39 // pred_region
          %s261 = sand.u32 %s96, 1
          %s262 = scalar_lea.sflag [#allocation4], %s261
          %s263 = sand.u32 %s96, 1
          %s264 = smul.addr %s263, 2
          %s265 = scalar_lea.vmem [#allocation5], %s264
          %267 = dma.done %s262, 32
        $region44: #{tpu_custom_call.1} parent=39 // pred_fallthru
          _
      $region40: #{tpu_custom_call.1} parent=5 // pred_fallthru
        _
    $region6: #{tpu_custom_call.1} parent=1 // loop_footer
      %s18 = sadd.s32 1, %s14
    $region7: #{tpu_custom_call.1} parent=1 // loop_footer_branch
      %13 = sbr.rel target = $region3
    $region8: #{tpu_custom_call.1} parent=1 // loop_exit
      _
    %268 = vsyncpa [#allocation3], 1
    %s269 = scalar_lea.sflag [#allocation3], 1
    %270 = vsyncpa %s269, 1
    %271 = vsyncpa [#allocation4], 1
    %s272 = scalar_lea.sflag [#allocation4], 1
    %273 = vsyncpa %s272, 1

</llo_original>
